<compile_context>
chip_gen: v7x
topology: tpu7x:2x2x1
jax: 0.10.0
libtpu: 0.0.40
codegen_flags: <defaults>
</compile_context>

<pallas_src>
import functools

import numpy as np
import jax
import jax.numpy as jnp
from jax import lax
from jax.experimental import pallas as pl
from jax.experimental.pallas import tpu as pltpu

# ---- module hyper-parameters (from the PyTorch module) ----
IN_CHANNELS = 32
OUT_CHANNELS = 16
KERNEL_SIZE = 3
STRIDE = 2
PADDING = 1
MIN_VALUE = -1.0
DIVISOR = 2.0

_NUM_CLASSES = 8          # 2x2x2 output parity classes
_NUM_SHIFTS = 8           # 2x2x2 input shifts

# Per-axis tap-selection tensor for the stride-2 / pad-1 / K-3 parity decomposition:
#   T[p, s, k] = 1 iff kernel tap k maps (input index m + shift s) -> output 2m + p.
#   even output (p=0): k=1 with shift 0
#   odd  output (p=1): k=2 with shift 0, k=0 with shift 1
_TAP = np.zeros((2, 2, KERNEL_SIZE), np.float32)
_TAP[0, 0, 1] = 1.0
_TAP[1, 0, 2] = 1.0
_TAP[1, 1, 0] = 1.0


def _pack_weights(w_pt):
    """ConvTranspose3d weight (Cin, Cout, K, K, K) -> packed (8*Cout, 8*Cin) slab."""
    cin, cout = w_pt.shape[0], w_pt.shape[1]
    t = jnp.asarray(_TAP, w_pt.dtype)
    # [pd,ph,pw,co,sd,sh,sw,ci] = sum_{kd,kh,kw} T T T * w_pt[ci,co,kd,kh,kw]
    w_all = jnp.einsum('adx,bey,cfz,ioxyz->abcodefi', t, t, t, w_pt)
    return w_all.reshape(_NUM_CLASSES * cout, _NUM_SHIFTS * cin)


def _convt_kernel(xs_ref, w_ref, b_ref, o_ref, *, min_value, inv_divisor):
    # xs_ref: (1, 8*Cin, M)   shift-stacked input slab for this batch
    # w_ref:  (8*Cout, 8*Cin) packed weights (all 8 parity classes)
    # b_ref:  (8*Cout, 1)     per-row bias
    # o_ref:  (1, 8*Cout, M)  lane-dense output rows
    acc = jnp.dot(w_ref[...], xs_ref[0], preferred_element_type=jnp.float32)
    acc = acc + b_ref[...]
    acc = jnp.maximum(acc, min_value)
    acc = acc * inv_divisor           # exact for divisor = 2.0
    o_ref[0] = acc.astype(o_ref.dtype)


@jax.jit
def conv_transpose3d_clamp_div(x_ncdhw, w_pt, b):
    """x_ncdhw: (N, Cin, D, H, W) float32 (PyTorch layout).
    w_pt: ConvTranspose3d weight (Cin, Cout, K, K, K).  b: (Cout,).
    Returns (N, Cout, Do, Ho, Wo), Do = (D-1)*STRIDE - 2*PADDING + K = 2D-1."""
    N, Cin, D, H, W = x_ncdhw.shape
    K = w_pt.shape[-1]
    Cout = w_pt.shape[1]
    # The parity decomposition below is specialised to this configuration.
    assert STRIDE == 2 and PADDING == 1 and K == 3, (STRIDE, PADDING, K)
    Do, Ho, Wo = 2 * D - 1, 2 * H - 1, 2 * W - 1
    M = D * H * W
    assert M % 128 == 0, "spatial volume must fill whole lane blocks"

    # Shift-stacked input: xs[n, s*Cin + ci, m] = x_pad[n, ci, d+sd, h+sh, w+sw]
    # (pure layout plumbing; fuses under jit).
    xp = jnp.pad(x_ncdhw, ((0, 0), (0, 0), (0, 1), (0, 1), (0, 1)))
    slabs = []
    for sd in range(2):
        for sh in range(2):
            for sw in range(2):
                slabs.append(xp[:, :, sd:sd + D, sh:sh + H, sw:sw + W])
    xs = jnp.stack(slabs, axis=1).reshape(N, _NUM_SHIFTS * Cin, M)

    w_all = _pack_weights(w_pt)                                   # (8*Cout, 8*Cin)
    b_all = jnp.tile(b, _NUM_CLASSES).reshape(_NUM_CLASSES * Cout, 1)

    rows = _NUM_CLASSES * Cout                                    # 128
    kdim = _NUM_SHIFTS * Cin                                      # 256

    kernel = functools.partial(_convt_kernel, min_value=MIN_VALUE,
                               inv_divisor=1.0 / DIVISOR)
    flops = 2 * N * rows * kdim * M
    bytes_accessed = 4 * (xs.size + w_all.size + b_all.size + N * rows * M)

    # TODO(synk): for much larger spatial shapes, add an M-tiling grid axis so the
    # double-buffered input slab stays within v7x's 64 MiB VMEM.
    y_all = pl.pallas_call(
        kernel,
        out_shape=jax.ShapeDtypeStruct((N, rows, M), x_ncdhw.dtype),
        grid_spec=pltpu.PrefetchScalarGridSpec(
            num_scalar_prefetch=0,
            grid=(N,),
            in_specs=[
                pl.BlockSpec((1, kdim, M), lambda n: (n, 0, 0)),
                pl.BlockSpec((rows, kdim), lambda n: (0, 0)),
                pl.BlockSpec((rows, 1), lambda n: (0, 0)),
            ],
            out_specs=pl.BlockSpec((1, rows, M), lambda n: (n, 0, 0)),
        ),
        compiler_params=pltpu.CompilerParams(
            dimension_semantics=("parallel",),
        ),
        cost_estimate=pl.CostEstimate(flops=flops, transcendentals=0,
                                      bytes_accessed=bytes_accessed),
    )(xs, w_all, b_all)

    # Parity re-interleave: single reshape -> transpose -> reshape -> slice.
    # out[n, co, 2d+pd, 2h+ph, 2w+pw] = y_all[n, pd, ph, pw, co, d, h, w];
    # the trailing :Do/:Ho/:Wo slice drops exactly the zero-pad-derived edge rows.
    y_all = y_all.reshape(N, 2, 2, 2, Cout, D, H, W)
    y_all = jnp.transpose(y_all, (0, 4, 5, 1, 6, 2, 7, 3))  # (N,Cout,D,2,H,2,W,2)
    out = y_all.reshape(N, Cout, 2 * D, 2 * H, 2 * W)[:, :, :Do, :Ho, :Wo]
    return out


def _reference(x_ncdhw, w_pt, b):
    """Plain-JAX reference: transposed conv via lhs-dilated conv, then clamp/div."""
    K = w_pt.shape[-1]
    x = jnp.transpose(x_ncdhw, (0, 2, 3, 4, 1))                   # NDHWC
    w = jnp.transpose(w_pt, (2, 3, 4, 0, 1))[::-1, ::-1, ::-1]    # (K,K,K,Cin,Cout)
    p = K - 1 - PADDING
    y = lax.conv_general_dilated(
        x, w, window_strides=(1, 1, 1), padding=[(p, p)] * 3,
        lhs_dilation=(STRIDE,) * 3,
        dimension_numbers=("NDHWC", "DHWIO", "NDHWC"))
    y = y + b[None, None, None, None, :]
    y = jnp.maximum(y, MIN_VALUE)
    y = y / DIVISOR
    return jnp.transpose(y, (0, 4, 1, 2, 3))                      # back to NCDHW


if __name__ == "__main__":
    key = jax.random.PRNGKey(0)
    k_x, k_w, k_b = jax.random.split(key, 3)

    # Small shapes: batch=2, Cin=32, Cout=16, spatial D=H=W=8 (PyTorch NCDHW layout).
    N, D, H, W = 2, 8, 8, 8
    x = jax.random.normal(k_x, (N, IN_CHANNELS, D, H, W), jnp.float32)

    fan_in = IN_CHANNELS * KERNEL_SIZE ** 3
    bound = 1.0 / (fan_in ** 0.5)
    w_pt = jax.random.uniform(
        k_w, (IN_CHANNELS, OUT_CHANNELS, KERNEL_SIZE, KERNEL_SIZE, KERNEL_SIZE),
        jnp.float32, minval=-bound, maxval=bound)
    bias = jax.random.uniform(k_b, (OUT_CHANNELS,), jnp.float32,
                              minval=-bound, maxval=bound)

    out = jax.block_until_ready(conv_transpose3d_clamp_div(x, w_pt, bias))
    ref = jax.block_until_ready(_reference(x, w_pt, bias))

    assert out.shape == ref.shape == (N, OUT_CHANNELS, 2 * D - 1, 2 * H - 1,
                                      2 * W - 1), (out.shape, ref.shape)
    assert jnp.allclose(out, ref, atol=1e-4, rtol=1e-4), "mismatch vs reference"

    print("KERNEL_OK")
</pallas_src>

<mosaic_0001>
module attributes {stable_mosaic.version = 11 : i64} {
  func.func @_convt_kernel(%arg0: i32, %arg1: memref<1x256x512xf32, #tpu.memory_space<vmem>>, %arg2: memref<128x256xf32, #tpu.memory_space<vmem>>, %arg3: memref<128x1xf32, #tpu.memory_space<vmem>>, %arg4: memref<1x128x512xf32, #tpu.memory_space<vmem>>) attributes {dimension_semantics = [#tpu.dimension_semantics<parallel>], iteration_bounds = array<i64: 2>, scalar_prefetch = 0 : i64, scratch_operands = 0 : i64, tpu.core_type = #tpu.core_type<tc>, window_params = [{transform_indices = @transform_0, window_bounds = array<i64: 1, 256, 512>}, {pipeline_mode = #tpu.pipeline_mode<synchronous>, transform_indices = @transform_1, window_bounds = array<i64: 128, 256>}, {pipeline_mode = #tpu.pipeline_mode<synchronous>, transform_indices = @transform_2, window_bounds = array<i64: 128, 1>}, {transform_indices = @transform_3, window_bounds = array<i64: 1, 128, 512>}]} {
    %c0 = arith.constant 0 : index
    %c0_0 = arith.constant 0 : index
    %0 = vector.load %arg2[%c0, %c0_0] : memref<128x256xf32, #tpu.memory_space<vmem>>, vector<128x256xf32>
    %c0_1 = arith.constant 0 : index
    %c0_2 = arith.constant 0 : index
    %c0_3 = arith.constant 0 : index
    %1 = vector.load %arg1[%c0_1, %c0_2, %c0_3] : memref<1x256x512xf32, #tpu.memory_space<vmem>>, vector<1x256x512xf32>
    %2 = vector.shape_cast %1 : vector<1x256x512xf32> to vector<256x512xf32>
    %cst = arith.constant dense<0.000000e+00> : vector<128x512xf32>
    %3 = tpu.matmul %0, %2, %cst {dimension_numbers = #tpu.dot_dimension_numbers<[1], [0], [0], [1], [0, 0, 1, 1], [], []>} : vector<128x256xf32>, vector<256x512xf32>, vector<128x512xf32> -> vector<128x512xf32>
    %c0_4 = arith.constant 0 : index
    %c0_5 = arith.constant 0 : index
    %4 = vector.load %arg3[%c0_4, %c0_5] : memref<128x1xf32, #tpu.memory_space<vmem>>, vector<128x1xf32>
    %5 = vector.broadcast %4 : vector<128x1xf32> to vector<128x512xf32>
    %6 = arith.addf %3, %5 : vector<128x512xf32>
    %cst_6 = arith.constant -1.000000e+00 : f32
    %7 = vector.broadcast %cst_6 : f32 to vector<128x512xf32>
    %8 = arith.maximumf %6, %7 : vector<128x512xf32>
    %cst_7 = arith.constant 5.000000e-01 : f32
    %9 = vector.broadcast %cst_7 : f32 to vector<128x512xf32>
    %10 = arith.mulf %8, %9 : vector<128x512xf32>
    %c0_8 = arith.constant 0 : index
    %c0_9 = arith.constant 0 : index
    %c0_10 = arith.constant 0 : index
    %11 = vector.load %arg4[%c0_8, %c0_9, %c0_10] : memref<1x128x512xf32, #tpu.memory_space<vmem>>, vector<1x128x512xf32>
    %12 = vector.shape_cast %11 : vector<1x128x512xf32> to vector<128x512xf32>
    %13 = vector.shape_cast %10 : vector<128x512xf32> to vector<1x128x512xf32>
    tpu.vector_store %arg4[%c0_8, %c0_9, %c0_10], %13 {strides = array<i32>} : memref<1x128x512xf32, #tpu.memory_space<vmem>>, vector<1x128x512xf32>,
    return
  }
  func.func @transform_0(%arg0: i32) -> (i32, i32, i32) {
    %c0_i32 = arith.constant 0 : i32
    %c0_i32_0 = arith.constant 0 : i32
    %c0_i32_1 = arith.constant 0 : i32
    return %arg0, %c0_i32, %c0_i32_0 : i32, i32, i32
  }
  func.func @transform_1(%arg0: i32) -> (i32, i32) {
    %c0_i32 = arith.constant 0 : i32
    %c0_i32_0 = arith.constant 0 : i32
    %c0_i32_1 = arith.constant 0 : i32
    return %c0_i32, %c0_i32_0 : i32, i32
  }
  func.func @transform_2(%arg0: i32) -> (i32, i32) {
    %c0_i32 = arith.constant 0 : i32
    %c0_i32_0 = arith.constant 0 : i32
    %c0_i32_1 = arith.constant 0 : i32
    return %c0_i32, %c0_i32_0 : i32, i32
  }
  func.func @transform_3(%arg0: i32) -> (i32, i32, i32) {
    %c0_i32 = arith.constant 0 : i32
    %c0_i32_0 = arith.constant 0 : i32
    %c0_i32_1 = arith.constant 0 : i32
    return %arg0, %c0_i32, %c0_i32_0 : i32, i32, i32
  }
}

</mosaic_0001>

<llo_original>
// kernel: tile.8
$region0: #{tile.8}
  #allocation0 [shape = 's32[1]{0}', space=sflag, size = 0x4, scoped, tag = 'scoped memory for tile.8']
  %s0 = inlined_call_operand.vmem [shape: f32[16], index: 0, kind: input, shape index: {}]
  %s1 = inlined_call_operand.vmem [shape: f32[8,16], index: 1, kind: output, shape index: {}]
  // Predicated region
  $region2: #{tile.8} parent=0 // pred_check
    _
  $region3: #{tile.8} parent=0 // pred_check_branch
    %3 = sbr.rel (0) target = $region5
  $region4: #{tile.8} parent=0 // pred_region
    _
  $region5: #{tile.8} parent=0 // pred_fallthru
    _
  %v4 = vld [vmem:[%s0] ss:$0 sm:$0xff]
  %5 = vst [vmem:[%s1] sm:$0xff] %v4

// kernel: tile.0
$region0: #{tile.0}
  %s0 = inlined_call_operand.vmem [shape: f32[8,16], index: 0, kind: input, shape index: {}]
  %s1 = inlined_call_operand.vmem [shape: f32[128,1], index: 1, kind: output, shape index: {}]
  %v2 = vld [vmem:[%s0] sm:$0xff]
  %vm3 = vcmask 7168
  %4 = vst.msk [vmem:[%s1] ss:$16 sm:$0x3] %vm3, %v2
  %5 = vst.msk [vmem:[%s1] ss:$16 sm:$0xc] %vm3, %v2
  %6 = vst.msk [vmem:[%s1] ss:$16 sm:$0x30] %vm3, %v2
  %7 = vst.msk [vmem:[%s1] ss:$16 sm:$0xc0] %vm3, %v2
  %v8 = vld [vmem:[%s0] sm:$0xff]
  %9 = vrot.lane.b32.xlu0 %v8, 127
  %v10 = vpop.permute.xlu0 %9
  %vm11 = vcmask 7168
  %s12 = scalar_lea.vmem %s1, 1
  %13 = vst.msk [vmem:[%s12] ss:$16 sm:$0x3] %vm11, %v10
  %s14 = scalar_lea.vmem %s1, 1
  %15 = vst.msk [vmem:[%s14] ss:$16 sm:$0xc] %vm11, %v10
  %s16 = scalar_lea.vmem %s1, 1
  %17 = vst.msk [vmem:[%s16] ss:$16 sm:$0x30] %vm11, %v10
  %s18 = scalar_lea.vmem %s1, 1
  %19 = vst.msk [vmem:[%s18] ss:$16 sm:$0xc0] %vm11, %v10
  %v20 = vld [vmem:[%s0] sm:$0xff]
  %21 = vrot.lane.b32.xlu0 %v20, 126
  %v22 = vpop.permute.xlu0 %21
  %vm23 = vcmask 7168
  %s24 = scalar_lea.vmem %s1, 2
  %25 = vst.msk [vmem:[%s24] ss:$16 sm:$0x3] %vm23, %v22
  %s26 = scalar_lea.vmem %s1, 2
  %27 = vst.msk [vmem:[%s26] ss:$16 sm:$0xc] %vm23, %v22
  %s28 = scalar_lea.vmem %s1, 2
  %29 = vst.msk [vmem:[%s28] ss:$16 sm:$0x30] %vm23, %v22
  %s30 = scalar_lea.vmem %s1, 2
  %31 = vst.msk [vmem:[%s30] ss:$16 sm:$0xc0] %vm23, %v22
  %v32 = vld [vmem:[%s0] sm:$0xff]
  %33 = vrot.lane.b32.xlu0 %v32, 125
  %v34 = vpop.permute.xlu0 %33
  %vm35 = vcmask 7168
  %s36 = scalar_lea.vmem %s1, 3
  %37 = vst.msk [vmem:[%s36] ss:$16 sm:$0x3] %vm35, %v34
  %s38 = scalar_lea.vmem %s1, 3
  %39 = vst.msk [vmem:[%s38] ss:$16 sm:$0xc] %vm35, %v34
  %s40 = scalar_lea.vmem %s1, 3
  %41 = vst.msk [vmem:[%s40] ss:$16 sm:$0x30] %vm35, %v34
  %s42 = scalar_lea.vmem %s1, 3
  %43 = vst.msk [vmem:[%s42] ss:$16 sm:$0xc0] %vm35, %v34
  %v44 = vld [vmem:[%s0] sm:$0xff]
  %45 = vrot.lane.b32.xlu0 %v44, 124
  %v46 = vpop.permute.xlu0 %45
  %vm47 = vcmask 7168
  %s48 = scalar_lea.vmem %s1, 4
  %49 = vst.msk [vmem:[%s48] ss:$16 sm:$0x3] %vm47, %v46
  %s50 = scalar_lea.vmem %s1, 4
  %51 = vst.msk [vmem:[%s50] ss:$16 sm:$0xc] %vm47, %v46
  %s52 = scalar_lea.vmem %s1, 4
  %53 = vst.msk [vmem:[%s52] ss:$16 sm:$0x30] %vm47, %v46
  %s54 = scalar_lea.vmem %s1, 4
  %55 = vst.msk [vmem:[%s54] ss:$16 sm:$0xc0] %vm47, %v46
  %v56 = vld [vmem:[%s0] sm:$0xff]
  %57 = vrot.lane.b32.xlu0 %v56, 123
  %v58 = vpop.permute.xlu0 %57
  %vm59 = vcmask 7168
  %s60 = scalar_lea.vmem %s1, 5
  %61 = vst.msk [vmem:[%s60] ss:$16 sm:$0x3] %vm59, %v58
  %s62 = scalar_lea.vmem %s1, 5
  %63 = vst.msk [vmem:[%s62] ss:$16 sm:$0xc] %vm59, %v58
  %s64 = scalar_lea.vmem %s1, 5
  %65 = vst.msk [vmem:[%s64] ss:$16 sm:$0x30] %vm59, %v58
  %s66 = scalar_lea.vmem %s1, 5
  %67 = vst.msk [vmem:[%s66] ss:$16 sm:$0xc0] %vm59, %v58
  %v68 = vld [vmem:[%s0] sm:$0xff]
  %69 = vrot.lane.b32.xlu0 %v68, 122
  %v70 = vpop.permute.xlu0 %69
  %vm71 = vcmask 7168
  %s72 = scalar_lea.vmem %s1, 6
  %73 = vst.msk [vmem:[%s72] ss:$16 sm:$0x3] %vm71, %v70
  %s74 = scalar_lea.vmem %s1, 6
  %75 = vst.msk [vmem:[%s74] ss:$16 sm:$0xc] %vm71, %v70
  %s76 = scalar_lea.vmem %s1, 6
  %77 = vst.msk [vmem:[%s76] ss:$16 sm:$0x30] %vm71, %v70
  %s78 = scalar_lea.vmem %s1, 6
  %79 = vst.msk [vmem:[%s78] ss:$16 sm:$0xc0] %vm71, %v70
  %v80 = vld [vmem:[%s0] sm:$0xff]
  %81 = vrot.lane.b32.xlu0 %v80, 121
  %v82 = vpop.permute.xlu0 %81
  %vm83 = vcmask 7168
  %s84 = scalar_lea.vmem %s1, 7
  %85 = vst.msk [vmem:[%s84] ss:$16 sm:$0x3] %vm83, %v82
  %s86 = scalar_lea.vmem %s1, 7
  %87 = vst.msk [vmem:[%s86] ss:$16 sm:$0xc] %vm83, %v82
  %s88 = scalar_lea.vmem %s1, 7
  %89 = vst.msk [vmem:[%s88] ss:$16 sm:$0x30] %vm83, %v82
  %s90 = scalar_lea.vmem %s1, 7
  %91 = vst.msk [vmem:[%s90] ss:$16 sm:$0xc0] %vm83, %v82
  %v92 = vld [vmem:[%s0] sm:$0xff]
  %93 = vrot.lane.b32.xlu0 %v92, 120
  %v94 = vpop.permute.xlu0 %93
  %vm95 = vcmask 7168
  %s96 = scalar_lea.vmem %s1, 8
  %97 = vst.msk [vmem:[%s96] ss:$16 sm:$0x3] %vm95, %v94
  %s98 = scalar_lea.vmem %s1, 8
  %99 = vst.msk [vmem:[%s98] ss:$16 sm:$0xc] %vm95, %v94
  %s100 = scalar_lea.vmem %s1, 8
  %101 = vst.msk [vmem:[%s100] ss:$16 sm:$0x30] %vm95, %v94
  %s102 = scalar_lea.vmem %s1, 8
  %103 = vst.msk [vmem:[%s102] ss:$16 sm:$0xc0] %vm95, %v94
  %v104 = vld [vmem:[%s0] sm:$0xff]
  %105 = vrot.lane.b32.xlu0 %v104, 119
  %v106 = vpop.permute.xlu0 %105
  %vm107 = vcmask 7168
  %s108 = scalar_lea.vmem %s1, 9
  %109 = vst.msk [vmem:[%s108] ss:$16 sm:$0x3] %vm107, %v106
  %s110 = scalar_lea.vmem %s1, 9
  %111 = vst.msk [vmem:[%s110] ss:$16 sm:$0xc] %vm107, %v106
  %s112 = scalar_lea.vmem %s1, 9
  %113 = vst.msk [vmem:[%s112] ss:$16 sm:$0x30] %vm107, %v106
  %s114 = scalar_lea.vmem %s1, 9
  %115 = vst.msk [vmem:[%s114] ss:$16 sm:$0xc0] %vm107, %v106
  %v116 = vld [vmem:[%s0] sm:$0xff]
  %117 = vrot.lane.b32.xlu0 %v116, 118
  %v118 = vpop.permute.xlu0 %117
  %vm119 = vcmask 7168
  %s120 = scalar_lea.vmem %s1, 10
  %121 = vst.msk [vmem:[%s120] ss:$16 sm:$0x3] %vm119, %v118
  %s122 = scalar_lea.vmem %s1, 10
  %123 = vst.msk [vmem:[%s122] ss:$16 sm:$0xc] %vm119, %v118
  %s124 = scalar_lea.vmem %s1, 10
  %125 = vst.msk [vmem:[%s124] ss:$16 sm:$0x30] %vm119, %v118
  %s126 = scalar_lea.vmem %s1, 10
  %127 = vst.msk [vmem:[%s126] ss:$16 sm:$0xc0] %vm119, %v118
  %v128 = vld [vmem:[%s0] sm:$0xff]
  %129 = vrot.lane.b32.xlu0 %v128, 117
  %v130 = vpop.permute.xlu0 %129
  %vm131 = vcmask 7168
  %s132 = scalar_lea.vmem %s1, 11
  %133 = vst.msk [vmem:[%s132] ss:$16 sm:$0x3] %vm131, %v130
  %s134 = scalar_lea.vmem %s1, 11
  %135 = vst.msk [vmem:[%s134] ss:$16 sm:$0xc] %vm131, %v130
  %s136 = scalar_lea.vmem %s1, 11
  %137 = vst.msk [vmem:[%s136] ss:$16 sm:$0x30] %vm131, %v130
  %s138 = scalar_lea.vmem %s1, 11
  %139 = vst.msk [vmem:[%s138] ss:$16 sm:$0xc0] %vm131, %v130
  %v140 = vld [vmem:[%s0] sm:$0xff]
  %141 = vrot.lane.b32.xlu0 %v140, 116
  %v142 = vpop.permute.xlu0 %141
  %vm143 = vcmask 7168
  %s144 = scalar_lea.vmem %s1, 12
  %145 = vst.msk [vmem:[%s144] ss:$16 sm:$0x3] %vm143, %v142
  %s146 = scalar_lea.vmem %s1, 12
  %147 = vst.msk [vmem:[%s146] ss:$16 sm:$0xc] %vm143, %v142
  %s148 = scalar_lea.vmem %s1, 12
  %149 = vst.msk [vmem:[%s148] ss:$16 sm:$0x30] %vm143, %v142
  %s150 = scalar_lea.vmem %s1, 12
  %151 = vst.msk [vmem:[%s150] ss:$16 sm:$0xc0] %vm143, %v142
  %v152 = vld [vmem:[%s0] sm:$0xff]
  %153 = vrot.lane.b32.xlu0 %v152, 115
  %v154 = vpop.permute.xlu0 %153
  %vm155 = vcmask 7168
  %s156 = scalar_lea.vmem %s1, 13
  %157 = vst.msk [vmem:[%s156] ss:$16 sm:$0x3] %vm155, %v154
  %s158 = scalar_lea.vmem %s1, 13
  %159 = vst.msk [vmem:[%s158] ss:$16 sm:$0xc] %vm155, %v154
  %s160 = scalar_lea.vmem %s1, 13
  %161 = vst.msk [vmem:[%s160] ss:$16 sm:$0x30] %vm155, %v154
  %s162 = scalar_lea.vmem %s1, 13
  %163 = vst.msk [vmem:[%s162] ss:$16 sm:$0xc0] %vm155, %v154
  %v164 = vld [vmem:[%s0] sm:$0xff]
  %165 = vrot.lane.b32.xlu0 %v164, 114
  %v166 = vpop.permute.xlu0 %165
  %vm167 = vcmask 7168
  %s168 = scalar_lea.vmem %s1, 14
  %169 = vst.msk [vmem:[%s168] ss:$16 sm:$0x3] %vm167, %v166
  %s170 = scalar_lea.vmem %s1, 14
  %171 = vst.msk [vmem:[%s170] ss:$16 sm:$0xc] %vm167, %v166
  %s172 = scalar_lea.vmem %s1, 14
  %173 = vst.msk [vmem:[%s172] ss:$16 sm:$0x30] %vm167, %v166
  %s174 = scalar_lea.vmem %s1, 14
  %175 = vst.msk [vmem:[%s174] ss:$16 sm:$0xc0] %vm167, %v166
  %v176 = vld [vmem:[%s0] sm:$0xff]
  %177 = vrot.lane.b32.xlu0 %v176, 113
  %v178 = vpop.permute.xlu0 %177
  %vm179 = vcmask 7168
  %s180 = scalar_lea.vmem %s1, 15
  %181 = vst.msk [vmem:[%s180] ss:$16 sm:$0x3] %vm179, %v178
  %s182 = scalar_lea.vmem %s1, 15
  %183 = vst.msk [vmem:[%s182] ss:$16 sm:$0xc] %vm179, %v178
  %s184 = scalar_lea.vmem %s1, 15
  %185 = vst.msk [vmem:[%s184] ss:$16 sm:$0x30] %vm179, %v178
  %s186 = scalar_lea.vmem %s1, 15
  %187 = vst.msk [vmem:[%s186] ss:$16 sm:$0xc0] %vm179, %v178

// kernel: conv_transpose3d_clamp_div.1
$region0: #{conv_transpose3d_clamp_div.1}
  #allocation0 [shape = 'u32[]', space=smem, size = 0x4, offset = 0x4, fixed_abs, tag = 'smem constant byte address 0x4 - core index']
  #allocation1 [shape = 'u32[144,128]{1,0:T(1,128)}', space=vmem, size = 0x12000, scoped, tag = 'internal scratch']
  %s0 = inlined_call_operand.vmem [shape: f32[2,256,512], index: 0, kind: input, shape index: {}]
  %s1 = inlined_call_operand.vmem [shape: f32[128,256], index: 1, kind: input, shape index: {}]
  %s2 = inlined_call_operand.vmem [shape: f32[128,1], index: 2, kind: input, shape index: {}]
  %s3 = inlined_call_operand.vmem [shape: f32[2,128,512], index: 3, kind: output, shape index: {}]
  %s4 = sld [smem:[#allocation0]]
  $region45: #{conv_transpose3d_clamp_div.1} parent=0
    _
  %s6 = ssub.s32 1, %s4
  %s7 = scalar_select 0, %s6, %s4
  loop: start=0, step=1, limit=4
  $region2: #{conv_transpose3d_clamp_div.1} parent=0 // loop_pre_header
    _
  $region3: #{conv_transpose3d_clamp_div.1} parent=0 // loop_header
    %s9 = sphi 0, %s13
    %p10 = scmp.ge.s32.totalorder %s9, 4
    %s19 = sphi 0, %s21
    %s22 = sphi 0, %s19
    %s23 = sphi 0, %s22
    %s39 = sphi 0, %s23
    %s43 = sphi 0, %s43
    %s45 = sphi 0, %s43
    %s46 = sphi 0, %s45
    %s60 = sphi 0, %s46
    %s64 = sphi 0, %s64
    %s66 = sphi 0, %s64
    %s67 = sphi 0, %s66
    %s81 = sphi 0, %s67
    %s87 = sphi 0, %s89
    %s90 = sphi 0, %s87
    %s91 = sphi 0, %s90
    %s107 = sphi 0, %s91
  $region4: #{conv_transpose3d_clamp_div.1} parent=0 // loop_header_branch
    %12 = sbr.rel (%p10) target = $region8
  $region5: #{conv_transpose3d_clamp_div.1} parent=0 // loop_body
    %s14 = ssub.s32 %s9, 1
    %s15 = ssub.s32 %s9, 2
    %s16 = sadd.s32 %s9, 1
    %s17 = ssub.s32 %s9, %s16
    %p18 = scmp.eq.s32.totalorder %s17, 0
    %s20 = sadd.s32 %s19, 1
    %s21 = scalar_select %p18, %s19, %s20
    %p24 = pneg %p18
    %p25 = scmp.eq.s32.totalorder %s9, 1
    %p26 = por %p24, %p25
    %p27 = scmp.ne.s32.totalorder %s19, %s22
    %p28 = scmp.eq.s32.totalorder %s9, 0
    %p29 = por %p27, %p28
    %p30 = scmp.ne.s32.totalorder %s19, %s22
    %p31 = scmp.eq.s32.totalorder %s14, 1
    %p32 = por %p30, %p31
    %p33 = scmp.ne.s32.totalorder %s22, %s23
    %p34 = scmp.eq.s32.totalorder %s14, 0
    %p35 = por %p33, %p34
    %p36 = scmp.ne.s32.totalorder %s22, %s23
    %p37 = scmp.eq.s32.totalorder %s15, 1
    %p38 = por %p36, %p37
    %p40 = scmp.ne.s32.totalorder %s23, %s39
    %p41 = scmp.eq.s32.totalorder %s15, 0
    %p42 = por %p40, %p41
    %s44 = sadd.s32 %s43, 1
    %p47 = scmp.eq.s32.totalorder %s9, 1
    %p48 = scmp.ne.s32.totalorder %s43, %s45
    %p49 = scmp.eq.s32.totalorder %s9, 0
    %p50 = por %p48, %p49
    %p51 = scmp.ne.s32.totalorder %s43, %s45
    %p52 = scmp.eq.s32.totalorder %s14, 1
    %p53 = por %p51, %p52
    %p54 = scmp.ne.s32.totalorder %s45, %s46
    %p55 = scmp.eq.s32.totalorder %s14, 0
    %p56 = por %p54, %p55
    %p57 = scmp.ne.s32.totalorder %s45, %s46
    %p58 = scmp.eq.s32.totalorder %s15, 1
    %p59 = por %p57, %p58
    %p61 = scmp.ne.s32.totalorder %s46, %s60
    %p62 = scmp.eq.s32.totalorder %s15, 0
    %p63 = por %p61, %p62
    %s65 = sadd.s32 %s64, 1
    %p68 = scmp.eq.s32.totalorder %s9, 1
    %p69 = scmp.ne.s32.totalorder %s64, %s66
    %p70 = scmp.eq.s32.totalorder %s9, 0
    %p71 = por %p69, %p70
    %p72 = scmp.ne.s32.totalorder %s64, %s66
    %p73 = scmp.eq.s32.totalorder %s14, 1
    %p74 = por %p72, %p73
    %p75 = scmp.ne.s32.totalorder %s66, %s67
    %p76 = scmp.eq.s32.totalorder %s14, 0
    %p77 = por %p75, %p76
    %p78 = scmp.ne.s32.totalorder %s66, %s67
    %p79 = scmp.eq.s32.totalorder %s15, 1
    %p80 = por %p78, %p79
    %p82 = scmp.ne.s32.totalorder %s67, %s81
    %p83 = scmp.eq.s32.totalorder %s15, 0
    %p84 = por %p82, %p83
    %s85 = ssub.s32 %s9, %s16
    %p86 = scmp.eq.s32.totalorder %s85, 0
    %s88 = sadd.s32 %s87, 1
    %s89 = scalar_select %p86, %s87, %s88
    %p92 = pneg %p86
    %p93 = scmp.eq.s32.totalorder %s9, 1
    %p94 = por %p92, %p93
    %p95 = scmp.ne.s32.totalorder %s87, %s90
    %p96 = scmp.eq.s32.totalorder %s9, 0
    %p97 = por %p95, %p96
    %p98 = scmp.ne.s32.totalorder %s87, %s90
    %p99 = scmp.eq.s32.totalorder %s14, 1
    %p100 = por %p98, %p99
    %p101 = scmp.ne.s32.totalorder %s90, %s91
    %p102 = scmp.eq.s32.totalorder %s14, 0
    %p103 = por %p101, %p102
    %p104 = scmp.ne.s32.totalorder %s90, %s91
    %p105 = scmp.eq.s32.totalorder %s15, 1
    %p106 = por %p104, %p105
    %p108 = scmp.ne.s32.totalorder %s91, %s107
    %p109 = scmp.eq.s32.totalorder %s15, 0
    %p110 = por %p108, %p109
    %p111 = scmp.le.s32.totalorder 1, %s9
    %p112 = scmp.lt.s32.totalorder %s9, 3
    %p113 = pnand %p111, %p112
    %p114 = pneg %p113
    // Predicated region
    $region9: #{conv_transpose3d_clamp_div.1} parent=5 // pred_check
      _
    $region10: #{conv_transpose3d_clamp_div.1} parent=5 // pred_check_branch
      %116 = sbr.rel (%p113) target = $region12
    $region11: #{conv_transpose3d_clamp_div.1} parent=5 // pred_region
      %s117 = ssub.s32 %s9, 1
      // Predicated region
      $region13: #{conv_transpose3d_clamp_div.1} parent=11 // pred_check
        %p118 = pneg %p56
      $region14: #{conv_transpose3d_clamp_div.1} parent=11 // pred_check_branch
        %120 = sbr.rel (%p118) target = $region16
      $region15: #{conv_transpose3d_clamp_div.1} parent=11 // pred_region
        _
      $region16: #{conv_transpose3d_clamp_div.1} parent=11 // pred_fallthru
        _
      // Predicated region
      $region17: #{conv_transpose3d_clamp_div.1} parent=11 // pred_check
        %p121 = pneg %p77
      $region18: #{conv_transpose3d_clamp_div.1} parent=11 // pred_check_branch
        %123 = sbr.rel (%p121) target = $region20
      $region19: #{conv_transpose3d_clamp_div.1} parent=11 // pred_region
        _
      $region20: #{conv_transpose3d_clamp_div.1} parent=11 // pred_fallthru
        _
    $region12: #{conv_transpose3d_clamp_div.1} parent=5 // pred_fallthru
      _
    %p124 = scmp.lt.s32.totalorder %s9, 2
    // Predicated region
    $region21: #{conv_transpose3d_clamp_div.1} parent=5 // pred_check
      %p125 = pneg %p124
    $region22: #{conv_transpose3d_clamp_div.1} parent=5 // pred_check_branch
      %127 = sbr.rel (%p125) target = $region24
    $region23: #{conv_transpose3d_clamp_div.1} parent=5 // pred_region
      // Predicated region
      $region25: #{conv_transpose3d_clamp_div.1} parent=23 // pred_check
        %p128 = pneg %p29
      $region26: #{conv_transpose3d_clamp_div.1} parent=23 // pred_check_branch
        %130 = sbr.rel (%p128) target = $region28
      $region27: #{conv_transpose3d_clamp_div.1} parent=23 // pred_region
        %p131 = scmp.lt.s32.totalorder %s9, 1
        %s132 = scalar_select %p131, %s9, 1
        %s133 = smul.addr %s132, 128
        %s134 = smul.addr %s133, 8
        %s135 = scalar_lea.vmem %s0, %s134
      $region28: #{conv_transpose3d_clamp_div.1} parent=23 // pred_fallthru
        _
    $region24: #{conv_transpose3d_clamp_div.1} parent=5 // pred_fallthru
      _
    %p136 = scmp.le.s32.totalorder 1, %s9
    %p137 = scmp.lt.s32.totalorder %s9, 3
    %p138 = pnand %p136, %p137
    %p139 = pneg %p138
    // Predicated region
    $region29: #{conv_transpose3d_clamp_div.1} parent=5 // pred_check
      _
    $region30: #{conv_transpose3d_clamp_div.1} parent=5 // pred_check_branch
      %141 = sbr.rel (%p138) target = $region32
    $region31: #{conv_transpose3d_clamp_div.1} parent=5 // pred_region
      %s142 = ssub.s32 %s9, 1
      %p143 = scmp.lt.s32.totalorder %s14, 1
      %s144 = scalar_select %p143, %s14, 1
      %s145 = smul.addr %s144, 128
      %s146 = smul.addr %s145, 8
      %s147 = scalar_lea.vmem %s0, %s146
      %p148 = pneg %p35
      %p149 = pneg %p32
      %p150 = pneg %p56
      %p151 = pneg %p53
      %p152 = pneg %p77
      %p153 = pneg %p74
      %p154 = pneg %p103
      %p155 = pneg %p100
      %p156 = scmp.lt.s32.totalorder %s14, 1
      %s157 = scalar_select %p156, %s14, 1
      %s158 = smul.addr %s157, 64
      %s159 = smul.addr %s158, 8
      %s160 = scalar_lea.vmem %s3, %s159
      %p161 = scmp.lt.s32.totalorder %s14, 1
      %s162 = scalar_select %p161, %s14, 1
      %s163 = smul.addr %s162, 128
      %s164 = smul.addr %s163, 8
      %s165 = scalar_lea.vmem %s0, %s164
      %p166 = scmp.lt.s32.totalorder %s14, 1
      %s167 = scalar_select %p166, %s14, 1
      %s168 = smul.addr %s167, 64
      %s169 = smul.addr %s168, 8
      %s170 = scalar_lea.vmem %s3, %s169
      %v171 = vld [vmem:[%s1] sm:$0xff]
      %v172 = vld [vmem:[%s1 + $0x8] sm:$0xff]
      %v173 = vld [vmem:[%s1 + $0x10] sm:$0xff]
      %v174 = vld [vmem:[%s1 + $0x18] sm:$0xff]
      %v175 = vld [vmem:[%s1 + $0x20] sm:$0xff]
      %v176 = vld [vmem:[%s1 + $0x28] sm:$0xff]
      %v177 = vld [vmem:[%s1 + $0x30] sm:$0xff]
      %v178 = vld [vmem:[%s1 + $0x38] sm:$0xff]
      %v179 = vld [vmem:[%s1 + $0x40] sm:$0xff]
      %v180 = vld [vmem:[%s1 + $0x48] sm:$0xff]
      %v181 = vld [vmem:[%s1 + $0x50] sm:$0xff]
      %v182 = vld [vmem:[%s1 + $0x58] sm:$0xff]
      %v183 = vld [vmem:[%s1 + $0x60] sm:$0xff]
      %v184 = vld [vmem:[%s1 + $0x68] sm:$0xff]
      %v185 = vld [vmem:[%s1 + $0x70] sm:$0xff]
      %v186 = vld [vmem:[%s1 + $0x78] sm:$0xff]
      %v187 = vld [vmem:[%s1 + $0x80] sm:$0xff]
      %v188 = vld [vmem:[%s1 + $0x88] sm:$0xff]
      %v189 = vld [vmem:[%s1 + $0x90] sm:$0xff]
      %v190 = vld [vmem:[%s1 + $0x98] sm:$0xff]
      %v191 = vld [vmem:[%s1 + $0xa0] sm:$0xff]
      %v192 = vld [vmem:[%s1 + $0xa8] sm:$0xff]
      %v193 = vld [vmem:[%s1 + $0xb0] sm:$0xff]
      %v194 = vld [vmem:[%s1 + $0xb8] sm:$0xff]
      %v195 = vld [vmem:[%s1 + $0xc0] sm:$0xff]
      %v196 = vld [vmem:[%s1 + $0xc8] sm:$0xff]
      %v197 = vld [vmem:[%s1 + $0xd0] sm:$0xff]
      %v198 = vld [vmem:[%s1 + $0xd8] sm:$0xff]
      %v199 = vld [vmem:[%s1 + $0xe0] sm:$0xff]
      %v200 = vld [vmem:[%s1 + $0xe8] sm:$0xff]
      %v201 = vld [vmem:[%s1 + $0xf0] sm:$0xff]
      %v202 = vld [vmem:[%s1 + $0xf8] sm:$0xff]
      %v203 = vld [vmem:[%s165] sm:$0xff]
      %v204 = vld [vmem:[%s165 + $0x8] sm:$0xff]
      %v205 = vld [vmem:[%s165 + $0x10] sm:$0xff]
      %v206 = vld [vmem:[%s165 + $0x18] sm:$0xff]
      %v207 = vld [vmem:[%s165 + $0x20] sm:$0xff]
      %v208 = vld [vmem:[%s165 + $0x28] sm:$0xff]
      %v209 = vld [vmem:[%s165 + $0x30] sm:$0xff]
      %v210 = vld [vmem:[%s165 + $0x38] sm:$0xff]
      %v211 = vld [vmem:[%s165 + $0x40] sm:$0xff]
      %v212 = vld [vmem:[%s165 + $0x48] sm:$0xff]
      %v213 = vld [vmem:[%s165 + $0x50] sm:$0xff]
      %v214 = vld [vmem:[%s165 + $0x58] sm:$0xff]
      %v215 = vld [vmem:[%s165 + $0x60] sm:$0xff]
      %v216 = vld [vmem:[%s165 + $0x68] sm:$0xff]
      %v217 = vld [vmem:[%s165 + $0x70] sm:$0xff]
      %v218 = vld [vmem:[%s165 + $0x78] sm:$0xff]
      %v219 = vld [vmem:[%s165 + $0x80] sm:$0xff]
      %v220 = vld [vmem:[%s165 + $0x88] sm:$0xff]
      %v221 = vld [vmem:[%s165 + $0x90] sm:$0xff]
      %v222 = vld [vmem:[%s165 + $0x98] sm:$0xff]
      %v223 = vld [vmem:[%s165 + $0xa0] sm:$0xff]
      %v224 = vld [vmem:[%s165 + $0xa8] sm:$0xff]
      %v225 = vld [vmem:[%s165 + $0xb0] sm:$0xff]
      %v226 = vld [vmem:[%s165 + $0xb8] sm:$0xff]
      %v227 = vld [vmem:[%s165 + $0xc0] sm:$0xff]
      %v228 = vld [vmem:[%s165 + $0xc8] sm:$0xff]
      %v229 = vld [vmem:[%s165 + $0xd0] sm:$0xff]
      %v230 = vld [vmem:[%s165 + $0xd8] sm:$0xff]
      %v231 = vld [vmem:[%s165 + $0xe0] sm:$0xff]
      %v232 = vld [vmem:[%s165 + $0xe8] sm:$0xff]
      %v233 = vld [vmem:[%s165 + $0xf0] sm:$0xff]
      %v234 = vld [vmem:[%s165 + $0xf8] sm:$0xff]
      %v235 = vld [vmem:[%s165 + $0x100] sm:$0xff]
      %v236 = vld [vmem:[%s165 + $0x108] sm:$0xff]
      %v237 = vld [vmem:[%s165 + $0x110] sm:$0xff]
      %v238 = vld [vmem:[%s165 + $0x118] sm:$0xff]
      %v239 = vld [vmem:[%s165 + $0x120] sm:$0xff]
      %v240 = vld [vmem:[%s165 + $0x128] sm:$0xff]
      %v241 = vld [vmem:[%s165 + $0x130] sm:$0xff]
      %v242 = vld [vmem:[%s165 + $0x138] sm:$0xff]
      %v243 = vld [vmem:[%s165 + $0x140] sm:$0xff]
      %v244 = vld [vmem:[%s165 + $0x148] sm:$0xff]
      %v245 = vld [vmem:[%s165 + $0x150] sm:$0xff]
      %v246 = vld [vmem:[%s165 + $0x158] sm:$0xff]
      %v247 = vld [vmem:[%s165 + $0x160] sm:$0xff]
      %v248 = vld [vmem:[%s165 + $0x168] sm:$0xff]
      %v249 = vld [vmem:[%s165 + $0x170] sm:$0xff]
      %v250 = vld [vmem:[%s165 + $0x178] sm:$0xff]
      %v251 = vld [vmem:[%s165 + $0x180] sm:$0xff]
      %v252 = vld [vmem:[%s165 + $0x188] sm:$0xff]
      %v253 = vld [vmem:[%s165 + $0x190] sm:$0xff]
      %v254 = vld [vmem:[%s165 + $0x198] sm:$0xff]
      %v255 = vld [vmem:[%s165 + $0x1a0] sm:$0xff]
      %v256 = vld [vmem:[%s165 + $0x1a8] sm:$0xff]
      %v257 = vld [vmem:[%s165 + $0x1b0] sm:$0xff]
      %v258 = vld [vmem:[%s165 + $0x1b8] sm:$0xff]
      %v259 = vld [vmem:[%s165 + $0x1c0] sm:$0xff]
      %v260 = vld [vmem:[%s165 + $0x1c8] sm:$0xff]
      %v261 = vld [vmem:[%s165 + $0x1d0] sm:$0xff]
      %v262 = vld [vmem:[%s165 + $0x1d8] sm:$0xff]
      %v263 = vld [vmem:[%s165 + $0x1e0] sm:$0xff]
      %v264 = vld [vmem:[%s165 + $0x1e8] sm:$0xff]
      %v265 = vld [vmem:[%s165 + $0x1f0] sm:$0xff]
      %v266 = vld [vmem:[%s165 + $0x1f8] sm:$0xff]
      %v267 = vld [vmem:[%s165 + $0x200] sm:$0xff]
      %v268 = vld [vmem:[%s165 + $0x208] sm:$0xff]
      %v269 = vld [vmem:[%s165 + $0x210] sm:$0xff]
      %v270 = vld [vmem:[%s165 + $0x218] sm:$0xff]
      %v271 = vld [vmem:[%s165 + $0x220] sm:$0xff]
      %v272 = vld [vmem:[%s165 + $0x228] sm:$0xff]
      %v273 = vld [vmem:[%s165 + $0x230] sm:$0xff]
      %v274 = vld [vmem:[%s165 + $0x238] sm:$0xff]
      %v275 = vld [vmem:[%s165 + $0x240] sm:$0xff]
      %v276 = vld [vmem:[%s165 + $0x248] sm:$0xff]
      %v277 = vld [vmem:[%s165 + $0x250] sm:$0xff]
      %v278 = vld [vmem:[%s165 + $0x258] sm:$0xff]
      %v279 = vld [vmem:[%s165 + $0x260] sm:$0xff]
      %v280 = vld [vmem:[%s165 + $0x268] sm:$0xff]
      %v281 = vld [vmem:[%s165 + $0x270] sm:$0xff]
      %v282 = vld [vmem:[%s165 + $0x278] sm:$0xff]
      %v283 = vld [vmem:[%s165 + $0x280] sm:$0xff]
      %v284 = vld [vmem:[%s165 + $0x288] sm:$0xff]
      %v285 = vld [vmem:[%s165 + $0x290] sm:$0xff]
      %v286 = vld [vmem:[%s165 + $0x298] sm:$0xff]
      %v287 = vld [vmem:[%s165 + $0x2a0] sm:$0xff]
      %v288 = vld [vmem:[%s165 + $0x2a8] sm:$0xff]
      %v289 = vld [vmem:[%s165 + $0x2b0] sm:$0xff]
      %v290 = vld [vmem:[%s165 + $0x2b8] sm:$0xff]
      %v291 = vld [vmem:[%s165 + $0x2c0] sm:$0xff]
      %v292 = vld [vmem:[%s165 + $0x2c8] sm:$0xff]
      %v293 = vld [vmem:[%s165 + $0x2d0] sm:$0xff]
      %v294 = vld [vmem:[%s165 + $0x2d8] sm:$0xff]
      %v295 = vld [vmem:[%s165 + $0x2e0] sm:$0xff]
      %v296 = vld [vmem:[%s165 + $0x2e8] sm:$0xff]
      %v297 = vld [vmem:[%s165 + $0x2f0] sm:$0xff]
      %v298 = vld [vmem:[%s165 + $0x2f8] sm:$0xff]
      %v299 = vld [vmem:[%s165 + $0x300] sm:$0xff]
      %v300 = vld [vmem:[%s165 + $0x308] sm:$0xff]
      %v301 = vld [vmem:[%s165 + $0x310] sm:$0xff]
      %v302 = vld [vmem:[%s165 + $0x318] sm:$0xff]
      %v303 = vld [vmem:[%s165 + $0x320] sm:$0xff]
      %v304 = vld [vmem:[%s165 + $0x328] sm:$0xff]
      %v305 = vld [vmem:[%s165 + $0x330] sm:$0xff]
      %v306 = vld [vmem:[%s165 + $0x338] sm:$0xff]
      %v307 = vld [vmem:[%s165 + $0x340] sm:$0xff]
      %v308 = vld [vmem:[%s165 + $0x348] sm:$0xff]
      %v309 = vld [vmem:[%s165 + $0x350] sm:$0xff]
      %v310 = vld [vmem:[%s165 + $0x358] sm:$0xff]
      %v311 = vld [vmem:[%s165 + $0x360] sm:$0xff]
      %v312 = vld [vmem:[%s165 + $0x368] sm:$0xff]
      %v313 = vld [vmem:[%s165 + $0x370] sm:$0xff]
      %v314 = vld [vmem:[%s165 + $0x378] sm:$0xff]
      %v315 = vld [vmem:[%s165 + $0x380] sm:$0xff]
      %v316 = vld [vmem:[%s165 + $0x388] sm:$0xff]
      %v317 = vld [vmem:[%s165 + $0x390] sm:$0xff]
      %v318 = vld [vmem:[%s165 + $0x398] sm:$0xff]
      %v319 = vld [vmem:[%s165 + $0x3a0] sm:$0xff]
      %v320 = vld [vmem:[%s165 + $0x3a8] sm:$0xff]
      %v321 = vld [vmem:[%s165 + $0x3b0] sm:$0xff]
      %v322 = vld [vmem:[%s165 + $0x3b8] sm:$0xff]
      %v323 = vld [vmem:[%s165 + $0x3c0] sm:$0xff]
      %v324 = vld [vmem:[%s165 + $0x3c8] sm:$0xff]
      %v325 = vld [vmem:[%s165 + $0x3d0] sm:$0xff]
      %v326 = vld [vmem:[%s165 + $0x3d8] sm:$0xff]
      %v327 = vld [vmem:[%s165 + $0x3e0] sm:$0xff]
      %v328 = vld [vmem:[%s165 + $0x3e8] sm:$0xff]
      %v329 = vld [vmem:[%s165 + $0x3f0] sm:$0xff]
      %v330 = vld [vmem:[%s165 + $0x3f8] sm:$0xff]
      %v331 = vld [vmem:[%s2] sm:$0xff]
      %v332 = vld [vmem:[%s2 + $0x8] sm:$0xff]
      %v333 = vld [vmem:[%s2 + $0x10] sm:$0xff]
      %v334 = vld [vmem:[%s2 + $0x18] sm:$0xff]
      %v335 = vld [vmem:[%s2 + $0x20] sm:$0xff]
      %v336 = vld [vmem:[%s2 + $0x28] sm:$0xff]
      %v337 = vld [vmem:[%s2 + $0x30] sm:$0xff]
      %v338 = vld [vmem:[%s2 + $0x38] sm:$0xff]
      %v339 = vld [vmem:[%s2 + $0x40] sm:$0xff]
      %v340 = vld [vmem:[%s2 + $0x48] sm:$0xff]
      %v341 = vld [vmem:[%s2 + $0x50] sm:$0xff]
      %v342 = vld [vmem:[%s2 + $0x58] sm:$0xff]
      %v343 = vld [vmem:[%s2 + $0x60] sm:$0xff]
      %v344 = vld [vmem:[%s2 + $0x68] sm:$0xff]
      %v345 = vld [vmem:[%s2 + $0x70] sm:$0xff]
      %v346 = vld [vmem:[%s2 + $0x78] sm:$0xff]
      %348 = vset.pattern.permute.xlu0 0
      %349 = vperm.xlu0 %348, %v331
      %v350 = vpop.permute.xlu0 %349
      %353 = vset.pattern.permute.xlu0 0
      %354 = vperm.xlu0 %353, %v332
      %v355 = vpop.permute.xlu0 %354
      %358 = vset.pattern.permute.xlu0 0
      %359 = vperm.xlu0 %358, %v333
      %v360 = vpop.permute.xlu0 %359
      %363 = vset.pattern.permute.xlu0 0
      %364 = vperm.xlu0 %363, %v334
      %v365 = vpop.permute.xlu0 %364
      %368 = vset.pattern.permute.xlu0 0
      %369 = vperm.xlu0 %368, %v335
      %v370 = vpop.permute.xlu0 %369
      %373 = vset.pattern.permute.xlu0 0
      %374 = vperm.xlu0 %373, %v336
      %v375 = vpop.permute.xlu0 %374
      %378 = vset.pattern.permute.xlu0 0
      %379 = vperm.xlu0 %378, %v337
      %v380 = vpop.permute.xlu0 %379
      %383 = vset.pattern.permute.xlu0 0
      %384 = vperm.xlu0 %383, %v338
      %v385 = vpop.permute.xlu0 %384
      %388 = vset.pattern.permute.xlu0 0
      %389 = vperm.xlu0 %388, %v339
      %v390 = vpop.permute.xlu0 %389
      %393 = vset.pattern.permute.xlu0 0
      %394 = vperm.xlu0 %393, %v340
      %v395 = vpop.permute.xlu0 %394
      %398 = vset.pattern.permute.xlu0 0
      %399 = vperm.xlu0 %398, %v341
      %v400 = vpop.permute.xlu0 %399
      %403 = vset.pattern.permute.xlu0 0
      %404 = vperm.xlu0 %403, %v342
      %v405 = vpop.permute.xlu0 %404
      %408 = vset.pattern.permute.xlu0 0
      %409 = vperm.xlu0 %408, %v343
      %v410 = vpop.permute.xlu0 %409
      %413 = vset.pattern.permute.xlu0 0
      %414 = vperm.xlu0 %413, %v344
      %v415 = vpop.permute.xlu0 %414
      %418 = vset.pattern.permute.xlu0 0
      %419 = vperm.xlu0 %418, %v345
      %v420 = vpop.permute.xlu0 %419
      %423 = vset.pattern.permute.xlu0 0
      %424 = vperm.xlu0 %423, %v346
      %v425 = vpop.permute.xlu0 %424
      %427 = vmatprep.subr.mxu0 %v204
      %428 = vmatpush1.msra.mxu0 %v203
      %429 = vmatprep.subr.mxu0 %v208
      %430 = vmatpush1.msra.mxu0 %v207
      %431 = vmatprep.subr.mxu0 %v212
      %432 = vmatpush1.msra.mxu0 %v211
      %433 = vmatprep.subr.mxu0 %v216
      %434 = vmatpush1.msra.mxu0 %v215
      %435 = vmatprep.subr.mxu0 %v220
      %436 = vmatpush1.msra.mxu0 %v219
      %437 = vmatprep.subr.mxu0 %v224
      %438 = vmatpush1.msra.mxu0 %v223
      %439 = vmatprep.subr.mxu0 %v228
      %440 = vmatpush1.msra.mxu0 %v227
      %441 = vmatprep.subr.mxu0 %v232
      %442 = vmatpush1.msra.mxu0 %v231
      %443 = vmatprep.subr.mxu0 %v236
      %444 = vmatpush1.msra.mxu0 %v235
      %445 = vmatprep.subr.mxu0 %v240
      %446 = vmatpush1.msra.mxu0 %v239
      %447 = vmatprep.subr.mxu0 %v244
      %448 = vmatpush1.msra.mxu0 %v243
      %449 = vmatprep.subr.mxu0 %v248
      %450 = vmatpush1.msra.mxu0 %v247
      %451 = vmatprep.subr.mxu0 %v252
      %452 = vmatpush1.msra.mxu0 %v251
      %453 = vmatprep.subr.mxu0 %v256
      %454 = vmatpush1.msra.mxu0 %v255
      %455 = vmatprep.subr.mxu0 %v260
      %456 = vmatpush1.msra.mxu0 %v259
      %457 = vmatprep.subr.mxu0 %v264
      %458 = vmatpush1.msra.mxu0 %v263
      %459 = vmatprep.subr.mxu0 %v268
      %460 = vmatpush1.msra.mxu0 %v267
      %461 = vmatprep.subr.mxu0 %v272
      %462 = vmatpush1.msra.mxu0 %v271
      %463 = vmatprep.subr.mxu0 %v276
      %464 = vmatpush1.msra.mxu0 %v275
      %465 = vmatprep.subr.mxu0 %v280
      %466 = vmatpush1.msra.mxu0 %v279
      %467 = vmatprep.subr.mxu0 %v284
      %468 = vmatpush1.msra.mxu0 %v283
      %469 = vmatprep.subr.mxu0 %v288
      %470 = vmatpush1.msra.mxu0 %v287
      %471 = vmatprep.subr.mxu0 %v292
      %472 = vmatpush1.msra.mxu0 %v291
      %473 = vmatprep.subr.mxu0 %v296
      %474 = vmatpush1.msra.mxu0 %v295
      %475 = vmatprep.subr.mxu0 %v300
      %476 = vmatpush1.msra.mxu0 %v299
      %477 = vmatprep.subr.mxu0 %v304
      %478 = vmatpush1.msra.mxu0 %v303
      %479 = vmatprep.subr.mxu0 %v308
      %480 = vmatpush1.msra.mxu0 %v307
      %481 = vmatprep.subr.mxu0 %v312
      %482 = vmatpush1.msra.mxu0 %v311
      %483 = vmatprep.subr.mxu0 %v316
      %484 = vmatpush1.msra.mxu0 %v315
      %485 = vmatprep.subr.mxu0 %v320
      %486 = vmatpush1.msra.mxu0 %v319
      %487 = vmatprep.subr.mxu0 %v324
      %488 = vmatpush1.msra.mxu0 %v323
      %489 = vmatprep.subr.mxu0 %v328
      %490 = vmatpush1.msra.mxu0 %v327
      %491 = vmatprep.mubr.f32.mxu0 %v172
      %492 = vmatmul.mubr.f32.gmra.mrb[0].mxu0 %v171
      %v493 = vpop.f32.mrb[0].mxu0
      %v494 = vadd.f32 %v350, %v493
      %v495 = vpop.f32.mrb[0].mxu0
      %v496 = vadd.f32 %v350, %v495
      %497 = vmatprep.mubr.f32.mxu0 %v174
      %498 = vmatmul.mubr.f32.gmra.mrb[0].mxu0 %v173
      %v499 = vpop.f32.mrb[0].mxu0
      %v500 = vadd.f32 %v355, %v499
      %v501 = vpop.f32.mrb[0].mxu0
      %v502 = vadd.f32 %v355, %v501
      %503 = vmatprep.mubr.f32.mxu0 %v176
      %504 = vmatmul.mubr.f32.gmra.mrb[0].mxu0 %v175
      %v505 = vpop.f32.mrb[0].mxu0
      %v506 = vadd.f32 %v360, %v505
      %v507 = vpop.f32.mrb[0].mxu0
      %v508 = vadd.f32 %v360, %v507
      %509 = vmatprep.mubr.f32.mxu0 %v178
      %510 = vmatmul.mubr.f32.gmra.mrb[0].mxu0 %v177
      %v511 = vpop.f32.mrb[0].mxu0
      %v512 = vadd.f32 %v365, %v511
      %v513 = vpop.f32.mrb[0].mxu0
      %v514 = vadd.f32 %v365, %v513
      %515 = vmatprep.mubr.f32.mxu0 %v180
      %516 = vmatmul.mubr.f32.gmra.mrb[0].mxu0 %v179
      %v517 = vpop.f32.mrb[0].mxu0
      %v518 = vadd.f32 %v370, %v517
      %v519 = vpop.f32.mrb[0].mxu0
      %v520 = vadd.f32 %v370, %v519
      %521 = vmatprep.mubr.f32.mxu0 %v182
      %522 = vmatmul.mubr.f32.gmra.mrb[0].mxu0 %v181
      %v523 = vpop.f32.mrb[0].mxu0
      %v524 = vadd.f32 %v375, %v523
      %v525 = vpop.f32.mrb[0].mxu0
      %v526 = vadd.f32 %v375, %v525
      %527 = vmatprep.mubr.f32.mxu0 %v184
      %528 = vmatmul.mubr.f32.gmra.mrb[0].mxu0 %v183
      %v529 = vpop.f32.mrb[0].mxu0
      %v530 = vadd.f32 %v380, %v529
      %v531 = vpop.f32.mrb[0].mxu0
      %v532 = vadd.f32 %v380, %v531
      %533 = vmatprep.mubr.f32.mxu0 %v186
      %534 = vmatmul.mubr.f32.gmra.mrb[0].mxu0 %v185
      %v535 = vpop.f32.mrb[0].mxu0
      %v536 = vadd.f32 %v385, %v535
      %v537 = vpop.f32.mrb[0].mxu0
      %v538 = vadd.f32 %v385, %v537
      %539 = vmatprep.mubr.f32.mxu0 %v188
      %540 = vmatmul.mubr.f32.gmra.mrb[0].mxu0 %v187
      %v541 = vpop.f32.mrb[0].mxu0
      %v542 = vadd.f32 %v390, %v541
      %v543 = vpop.f32.mrb[0].mxu0
      %v544 = vadd.f32 %v390, %v543
      %545 = vmatprep.mubr.f32.mxu0 %v190
      %546 = vmatmul.mubr.f32.gmra.mrb[0].mxu0 %v189
      %v547 = vpop.f32.mrb[0].mxu0
      %v548 = vadd.f32 %v395, %v547
      %v549 = vpop.f32.mrb[0].mxu0
      %v550 = vadd.f32 %v395, %v549
      %551 = vmatprep.mubr.f32.mxu0 %v192
      %552 = vmatmul.mubr.f32.gmra.mrb[0].mxu0 %v191
      %v553 = vpop.f32.mrb[0].mxu0
      %v554 = vadd.f32 %v400, %v553
      %v555 = vpop.f32.mrb[0].mxu0
      %v556 = vadd.f32 %v400, %v555
      %557 = vmatprep.mubr.f32.mxu0 %v194
      %558 = vmatmul.mubr.f32.gmra.mrb[0].mxu0 %v193
      %v559 = vpop.f32.mrb[0].mxu0
      %v560 = vadd.f32 %v405, %v559
      %v561 = vpop.f32.mrb[0].mxu0
      %v562 = vadd.f32 %v405, %v561
      %563 = vmatprep.mubr.f32.mxu0 %v196
      %564 = vmatmul.mubr.f32.gmra.mrb[0].mxu0 %v195
      %v565 = vpop.f32.mrb[0].mxu0
      %v566 = vadd.f32 %v410, %v565
      %v567 = vpop.f32.mrb[0].mxu0
      %v568 = vadd.f32 %v410, %v567
      %569 = vmatprep.mubr.f32.mxu0 %v198
      %570 = vmatmul.mubr.f32.gmra.mrb[0].mxu0 %v197
      %v571 = vpop.f32.mrb[0].mxu0
      %v572 = vadd.f32 %v415, %v571
      %v573 = vpop.f32.mrb[0].mxu0
      %v574 = vadd.f32 %v415, %v573
      %575 = vmatprep.mubr.f32.mxu0 %v200
      %576 = vmatmul.mubr.f32.gmra.mrb[0].mxu0 %v199
      %v577 = vpop.f32.mrb[0].mxu0
      %v578 = vadd.f32 %v420, %v577
      %v579 = vpop.f32.mrb[0].mxu0
      %v580 = vadd.f32 %v420, %v579
      %581 = vmatprep.mubr.f32.mxu0 %v202
      %582 = vmatmul.mubr.f32.gmra.mrb[0].mxu0 %v201
      %v583 = vpop.f32.mrb[0].mxu0
      %v584 = vadd.f32 %v425, %v583
      %v585 = vpop.f32.mrb[0].mxu0
      %v586 = vadd.f32 %v425, %v585
      %587 = vdwg.mxu0
      %588 = vmatprep.subr.mxu0 %v206
      %589 = vmatpush1.msra.mxu0 %v205
      %590 = vmatprep.subr.mxu0 %v210
      %591 = vmatpush1.msra.mxu0 %v209
      %592 = vmatprep.subr.mxu0 %v214
      %593 = vmatpush1.msra.mxu0 %v213
      %594 = vmatprep.subr.mxu0 %v218
      %595 = vmatpush1.msra.mxu0 %v217
      %596 = vmatprep.subr.mxu0 %v222
      %597 = vmatpush1.msra.mxu0 %v221
      %598 = vmatprep.subr.mxu0 %v226
      %599 = vmatpush1.msra.mxu0 %v225
      %600 = vmatprep.subr.mxu0 %v230
      %601 = vmatpush1.msra.mxu0 %v229
      %602 = vmatprep.subr.mxu0 %v234
      %603 = vmatpush1.msra.mxu0 %v233
      %604 = vmatprep.subr.mxu0 %v238
      %605 = vmatpush1.msra.mxu0 %v237
      %606 = vmatprep.subr.mxu0 %v242
      %607 = vmatpush1.msra.mxu0 %v241
      %608 = vmatprep.subr.mxu0 %v246
      %609 = vmatpush1.msra.mxu0 %v245
      %610 = vmatprep.subr.mxu0 %v250
      %611 = vmatpush1.msra.mxu0 %v249
      %612 = vmatprep.subr.mxu0 %v254
      %613 = vmatpush1.msra.mxu0 %v253
      %614 = vmatprep.subr.mxu0 %v258
      %615 = vmatpush1.msra.mxu0 %v257
      %616 = vmatprep.subr.mxu0 %v262
      %617 = vmatpush1.msra.mxu0 %v261
      %618 = vmatprep.subr.mxu0 %v266
      %619 = vmatpush1.msra.mxu0 %v265
      %620 = vmatprep.subr.mxu0 %v270
      %621 = vmatpush1.msra.mxu0 %v269
      %622 = vmatprep.subr.mxu0 %v274
      %623 = vmatpush1.msra.mxu0 %v273
      %624 = vmatprep.subr.mxu0 %v278
      %625 = vmatpush1.msra.mxu0 %v277
      %626 = vmatprep.subr.mxu0 %v282
      %627 = vmatpush1.msra.mxu0 %v281
      %628 = vmatprep.subr.mxu0 %v286
      %629 = vmatpush1.msra.mxu0 %v285
      %630 = vmatprep.subr.mxu0 %v290
      %631 = vmatpush1.msra.mxu0 %v289
      %632 = vmatprep.subr.mxu0 %v294
      %633 = vmatpush1.msra.mxu0 %v293
      %634 = vmatprep.subr.mxu0 %v298
      %635 = vmatpush1.msra.mxu0 %v297
      %636 = vmatprep.subr.mxu0 %v302
      %637 = vmatpush1.msra.mxu0 %v301
      %638 = vmatprep.subr.mxu0 %v306
      %639 = vmatpush1.msra.mxu0 %v305
      %640 = vmatprep.subr.mxu0 %v310
      %641 = vmatpush1.msra.mxu0 %v309
      %642 = vmatprep.subr.mxu0 %v314
      %643 = vmatpush1.msra.mxu0 %v313
      %644 = vmatprep.subr.mxu0 %v318
      %645 = vmatpush1.msra.mxu0 %v317
      %646 = vmatprep.subr.mxu0 %v322
      %647 = vmatpush1.msra.mxu0 %v321
      %648 = vmatprep.subr.mxu0 %v326
      %649 = vmatpush1.msra.mxu0 %v325
      %650 = vmatprep.subr.mxu0 %v330
      %651 = vmatpush1.msra.mxu0 %v329
      %652 = vmatprep.mubr.f32.mxu0 %v172
      %653 = vmatmul.mubr.f32.gmra.mrb[0].mxu0 %v171
      %v654 = vpop.f32.mrb[0].mxu0
      %v655 = vadd.f32 %v350, %v654
      %v656 = vpop.f32.mrb[0].mxu0
      %v657 = vadd.f32 %v350, %v656
      %658 = vmatprep.mubr.f32.mxu0 %v174
      %659 = vmatmul.mubr.f32.gmra.mrb[0].mxu0 %v173
      %v660 = vpop.f32.mrb[0].mxu0
      %v661 = vadd.f32 %v355, %v660
      %v662 = vpop.f32.mrb[0].mxu0
      %v663 = vadd.f32 %v355, %v662
      %664 = vmatprep.mubr.f32.mxu0 %v176
      %665 = vmatmul.mubr.f32.gmra.mrb[0].mxu0 %v175
      %v666 = vpop.f32.mrb[0].mxu0
      %v667 = vadd.f32 %v360, %v666
      %v668 = vpop.f32.mrb[0].mxu0
      %v669 = vadd.f32 %v360, %v668
      %670 = vmatprep.mubr.f32.mxu0 %v178
      %671 = vmatmul.mubr.f32.gmra.mrb[0].mxu0 %v177
      %v672 = vpop.f32.mrb[0].mxu0
      %v673 = vadd.f32 %v365, %v672
      %v674 = vpop.f32.mrb[0].mxu0
      %v675 = vadd.f32 %v365, %v674
      %676 = vmatprep.mubr.f32.mxu0 %v180
      %677 = vmatmul.mubr.f32.gmra.mrb[0].mxu0 %v179
      %v678 = vpop.f32.mrb[0].mxu0
      %v679 = vadd.f32 %v370, %v678
      %v680 = vpop.f32.mrb[0].mxu0
      %v681 = vadd.f32 %v370, %v680
      %682 = vmatprep.mubr.f32.mxu0 %v182
      %683 = vmatmul.mubr.f32.gmra.mrb[0].mxu0 %v181
      %v684 = vpop.f32.mrb[0].mxu0
      %v685 = vadd.f32 %v375, %v684
      %v686 = vpop.f32.mrb[0].mxu0
      %v687 = vadd.f32 %v375, %v686
      %688 = vmatprep.mubr.f32.mxu0 %v184
      %689 = vmatmul.mubr.f32.gmra.mrb[0].mxu0 %v183
      %v690 = vpop.f32.mrb[0].mxu0
      %v691 = vadd.f32 %v380, %v690
      %v692 = vpop.f32.mrb[0].mxu0
      %v693 = vadd.f32 %v380, %v692
      %694 = vmatprep.mubr.f32.mxu0 %v186
      %695 = vmatmul.mubr.f32.gmra.mrb[0].mxu0 %v185
      %v696 = vpop.f32.mrb[0].mxu0
      %v697 = vadd.f32 %v385, %v696
      %v698 = vpop.f32.mrb[0].mxu0
      %v699 = vadd.f32 %v385, %v698
      %700 = vmatprep.mubr.f32.mxu0 %v188
      %701 = vmatmul.mubr.f32.gmra.mrb[0].mxu0 %v187
      %v702 = vpop.f32.mrb[0].mxu0
      %v703 = vadd.f32 %v390, %v702
      %v704 = vpop.f32.mrb[0].mxu0
      %v705 = vadd.f32 %v390, %v704
      %706 = vmatprep.mubr.f32.mxu0 %v190
      %707 = vmatmul.mubr.f32.gmra.mrb[0].mxu0 %v189
      %v708 = vpop.f32.mrb[0].mxu0
      %v709 = vadd.f32 %v395, %v708
      %v710 = vpop.f32.mrb[0].mxu0
      %v711 = vadd.f32 %v395, %v710
      %712 = vmatprep.mubr.f32.mxu0 %v192
      %713 = vmatmul.mubr.f32.gmra.mrb[0].mxu0 %v191
      %v714 = vpop.f32.mrb[0].mxu0
      %v715 = vadd.f32 %v400, %v714
      %v716 = vpop.f32.mrb[0].mxu0
      %v717 = vadd.f32 %v400, %v716
      %718 = vmatprep.mubr.f32.mxu0 %v194
      %719 = vmatmul.mubr.f32.gmra.mrb[0].mxu0 %v193
      %v720 = vpop.f32.mrb[0].mxu0
      %v721 = vadd.f32 %v405, %v720
      %v722 = vpop.f32.mrb[0].mxu0
      %v723 = vadd.f32 %v405, %v722
      %724 = vmatprep.mubr.f32.mxu0 %v196
      %725 = vmatmul.mubr.f32.gmra.mrb[0].mxu0 %v195
      %v726 = vpop.f32.mrb[0].mxu0
      %v727 = vadd.f32 %v410, %v726
      %v728 = vpop.f32.mrb[0].mxu0
      %v729 = vadd.f32 %v410, %v728
      %730 = vmatprep.mubr.f32.mxu0 %v198
      %731 = vmatmul.mubr.f32.gmra.mrb[0].mxu0 %v197
      %v732 = vpop.f32.mrb[0].mxu0
      %v733 = vadd.f32 %v415, %v732
      %v734 = vpop.f32.mrb[0].mxu0
      %v735 = vadd.f32 %v415, %v734
      %736 = vmatprep.mubr.f32.mxu0 %v200
      %737 = vmatmul.mubr.f32.gmra.mrb[0].mxu0 %v199
      %v738 = vpop.f32.mrb[0].mxu0
      %v739 = vadd.f32 %v420, %v738
      %v740 = vpop.f32.mrb[0].mxu0
      %v741 = vadd.f32 %v420, %v740
      %742 = vmatprep.mubr.f32.mxu0 %v202
      %743 = vmatmul.mubr.f32.gmra.mrb[0].mxu0 %v201
      %v744 = vpop.f32.mrb[0].mxu0
      %v745 = vadd.f32 %v425, %v744
      %v746 = vpop.f32.mrb[0].mxu0
      %v747 = vadd.f32 %v425, %v746
      %748 = vdwg.mxu0
      %v749 = vmax.f32 %v494, -1.0
      %v750 = vmax.f32 %v496, -1.0
      %v751 = vmax.f32 %v655, -1.0
      %v752 = vmax.f32 %v657, -1.0
      %v753 = vmax.f32 %v500, -1.0
      %v754 = vmax.f32 %v502, -1.0
      %v755 = vmax.f32 %v661, -1.0
      %v756 = vmax.f32 %v663, -1.0
      %v757 = vmax.f32 %v506, -1.0
      %v758 = vmax.f32 %v508, -1.0
      %v759 = vmax.f32 %v667, -1.0
      %v760 = vmax.f32 %v669, -1.0
      %v761 = vmax.f32 %v512, -1.0
      %v762 = vmax.f32 %v514, -1.0
      %v763 = vmax.f32 %v673, -1.0
      %v764 = vmax.f32 %v675, -1.0
      %v765 = vmax.f32 %v518, -1.0
      %v766 = vmax.f32 %v520, -1.0
      %v767 = vmax.f32 %v679, -1.0
      %v768 = vmax.f32 %v681, -1.0
      %v769 = vmax.f32 %v524, -1.0
      %v770 = vmax.f32 %v526, -1.0
      %v771 = vmax.f32 %v685, -1.0
      %v772 = vmax.f32 %v687, -1.0
      %v773 = vmax.f32 %v530, -1.0
      %v774 = vmax.f32 %v532, -1.0
      %v775 = vmax.f32 %v691, -1.0
      %v776 = vmax.f32 %v693, -1.0
      %v777 = vmax.f32 %v536, -1.0
      %v778 = vmax.f32 %v538, -1.0
      %v779 = vmax.f32 %v697, -1.0
      %v780 = vmax.f32 %v699, -1.0
      %v781 = vmax.f32 %v542, -1.0
      %v782 = vmax.f32 %v544, -1.0
      %v783 = vmax.f32 %v703, -1.0
      %v784 = vmax.f32 %v705, -1.0
      %v785 = vmax.f32 %v548, -1.0
      %v786 = vmax.f32 %v550, -1.0
      %v787 = vmax.f32 %v709, -1.0
      %v788 = vmax.f32 %v711, -1.0
      %v789 = vmax.f32 %v554, -1.0
      %v790 = vmax.f32 %v556, -1.0
      %v791 = vmax.f32 %v715, -1.0
      %v792 = vmax.f32 %v717, -1.0
      %v793 = vmax.f32 %v560, -1.0
      %v794 = vmax.f32 %v562, -1.0
      %v795 = vmax.f32 %v721, -1.0
      %v796 = vmax.f32 %v723, -1.0
      %v797 = vmax.f32 %v566, -1.0
      %v798 = vmax.f32 %v568, -1.0
      %v799 = vmax.f32 %v727, -1.0
      %v800 = vmax.f32 %v729, -1.0
      %v801 = vmax.f32 %v572, -1.0
      %v802 = vmax.f32 %v574, -1.0
      %v803 = vmax.f32 %v733, -1.0
      %v804 = vmax.f32 %v735, -1.0
      %v805 = vmax.f32 %v578, -1.0
      %v806 = vmax.f32 %v580, -1.0
      %v807 = vmax.f32 %v739, -1.0
      %v808 = vmax.f32 %v741, -1.0
      %v809 = vmax.f32 %v584, -1.0
      %v810 = vmax.f32 %v586, -1.0
      %v811 = vmax.f32 %v745, -1.0
      %v812 = vmax.f32 %v747, -1.0
      %v813 = vmul.f32 %v749, 0.5
      %v814 = vmul.f32 %v750, 0.5
      %v815 = vmul.f32 %v751, 0.5
      %v816 = vmul.f32 %v752, 0.5
      %v817 = vmul.f32 %v753, 0.5
      %v818 = vmul.f32 %v754, 0.5
      %v819 = vmul.f32 %v755, 0.5
      %v820 = vmul.f32 %v756, 0.5
      %v821 = vmul.f32 %v757, 0.5
      %v822 = vmul.f32 %v758, 0.5
      %v823 = vmul.f32 %v759, 0.5
      %v824 = vmul.f32 %v760, 0.5
      %v825 = vmul.f32 %v761, 0.5
      %v826 = vmul.f32 %v762, 0.5
      %v827 = vmul.f32 %v763, 0.5
      %v828 = vmul.f32 %v764, 0.5
      %v829 = vmul.f32 %v765, 0.5
      %v830 = vmul.f32 %v766, 0.5
      %v831 = vmul.f32 %v767, 0.5
      %v832 = vmul.f32 %v768, 0.5
      %v833 = vmul.f32 %v769, 0.5
      %v834 = vmul.f32 %v770, 0.5
      %v835 = vmul.f32 %v771, 0.5
      %v836 = vmul.f32 %v772, 0.5
      %v837 = vmul.f32 %v773, 0.5
      %v838 = vmul.f32 %v774, 0.5
      %v839 = vmul.f32 %v775, 0.5
      %v840 = vmul.f32 %v776, 0.5
      %v841 = vmul.f32 %v777, 0.5
      %v842 = vmul.f32 %v778, 0.5
      %v843 = vmul.f32 %v779, 0.5
      %v844 = vmul.f32 %v780, 0.5
      %v845 = vmul.f32 %v781, 0.5
      %v846 = vmul.f32 %v782, 0.5
      %v847 = vmul.f32 %v783, 0.5
      %v848 = vmul.f32 %v784, 0.5
      %v849 = vmul.f32 %v785, 0.5
      %v850 = vmul.f32 %v786, 0.5
      %v851 = vmul.f32 %v787, 0.5
      %v852 = vmul.f32 %v788, 0.5
      %v853 = vmul.f32 %v789, 0.5
      %v854 = vmul.f32 %v790, 0.5
      %v855 = vmul.f32 %v791, 0.5
      %v856 = vmul.f32 %v792, 0.5
      %v857 = vmul.f32 %v793, 0.5
      %v858 = vmul.f32 %v794, 0.5
      %v859 = vmul.f32 %v795, 0.5
      %v860 = vmul.f32 %v796, 0.5
      %v861 = vmul.f32 %v797, 0.5
      %v862 = vmul.f32 %v798, 0.5
      %v863 = vmul.f32 %v799, 0.5
      %v864 = vmul.f32 %v800, 0.5
      %v865 = vmul.f32 %v801, 0.5
      %v866 = vmul.f32 %v802, 0.5
      %v867 = vmul.f32 %v803, 0.5
      %v868 = vmul.f32 %v804, 0.5
      %v869 = vmul.f32 %v805, 0.5
      %v870 = vmul.f32 %v806, 0.5
      %v871 = vmul.f32 %v807, 0.5
      %v872 = vmul.f32 %v808, 0.5
      %v873 = vmul.f32 %v809, 0.5
      %v874 = vmul.f32 %v810, 0.5
      %v875 = vmul.f32 %v811, 0.5
      %v876 = vmul.f32 %v812, 0.5
      %877 = vst [vmem:[%s170] sm:$0xff] %v813
      %878 = vst [vmem:[%s170 + $0x8] sm:$0xff] %v814
      %879 = vst [vmem:[%s170 + $0x10] sm:$0xff] %v815
      %880 = vst [vmem:[%s170 + $0x18] sm:$0xff] %v816
      %881 = vst [vmem:[%s170 + $0x20] sm:$0xff] %v817
      %882 = vst [vmem:[%s170 + $0x28] sm:$0xff] %v818
      %883 = vst [vmem:[%s170 + $0x30] sm:$0xff] %v819
      %884 = vst [vmem:[%s170 + $0x38] sm:$0xff] %v820
      %885 = vst [vmem:[%s170 + $0x40] sm:$0xff] %v821
      %886 = vst [vmem:[%s170 + $0x48] sm:$0xff] %v822
      %887 = vst [vmem:[%s170 + $0x50] sm:$0xff] %v823
      %888 = vst [vmem:[%s170 + $0x58] sm:$0xff] %v824
      %889 = vst [vmem:[%s170 + $0x60] sm:$0xff] %v825
      %890 = vst [vmem:[%s170 + $0x68] sm:$0xff] %v826
      %891 = vst [vmem:[%s170 + $0x70] sm:$0xff] %v827
      %892 = vst [vmem:[%s170 + $0x78] sm:$0xff] %v828
      %893 = vst [vmem:[%s170 + $0x80] sm:$0xff] %v829
      %894 = vst [vmem:[%s170 + $0x88] sm:$0xff] %v830
      %895 = vst [vmem:[%s170 + $0x90] sm:$0xff] %v831
      %896 = vst [vmem:[%s170 + $0x98] sm:$0xff] %v832
      %897 = vst [vmem:[%s170 + $0xa0] sm:$0xff] %v833
      %898 = vst [vmem:[%s170 + $0xa8] sm:$0xff] %v834
      %899 = vst [vmem:[%s170 + $0xb0] sm:$0xff] %v835
      %900 = vst [vmem:[%s170 + $0xb8] sm:$0xff] %v836
      %901 = vst [vmem:[%s170 + $0xc0] sm:$0xff] %v837
      %902 = vst [vmem:[%s170 + $0xc8] sm:$0xff] %v838
      %903 = vst [vmem:[%s170 + $0xd0] sm:$0xff] %v839
      %904 = vst [vmem:[%s170 + $0xd8] sm:$0xff] %v840
      %905 = vst [vmem:[%s170 + $0xe0] sm:$0xff] %v841
      %906 = vst [vmem:[%s170 + $0xe8] sm:$0xff] %v842
      %907 = vst [vmem:[%s170 + $0xf0] sm:$0xff] %v843
      %908 = vst [vmem:[%s170 + $0xf8] sm:$0xff] %v844
      %909 = vst [vmem:[%s170 + $0x100] sm:$0xff] %v845
      %910 = vst [vmem:[%s170 + $0x108] sm:$0xff] %v846
      %911 = vst [vmem:[%s170 + $0x110] sm:$0xff] %v847
      %912 = vst [vmem:[%s170 + $0x118] sm:$0xff] %v848
      %913 = vst [vmem:[%s170 + $0x120] sm:$0xff] %v849
      %914 = vst [vmem:[%s170 + $0x128] sm:$0xff] %v850
      %915 = vst [vmem:[%s170 + $0x130] sm:$0xff] %v851
      %916 = vst [vmem:[%s170 + $0x138] sm:$0xff] %v852
      %917 = vst [vmem:[%s170 + $0x140] sm:$0xff] %v853
      %918 = vst [vmem:[%s170 + $0x148] sm:$0xff] %v854
      %919 = vst [vmem:[%s170 + $0x150] sm:$0xff] %v855
      %920 = vst [vmem:[%s170 + $0x158] sm:$0xff] %v856
      %921 = vst [vmem:[%s170 + $0x160] sm:$0xff] %v857
      %922 = vst [vmem:[%s170 + $0x168] sm:$0xff] %v858
      %923 = vst [vmem:[%s170 + $0x170] sm:$0xff] %v859
      %924 = vst [vmem:[%s170 + $0x178] sm:$0xff] %v860
      %925 = vst [vmem:[%s170 + $0x180] sm:$0xff] %v861
      %926 = vst [vmem:[%s170 + $0x188] sm:$0xff] %v862
      %927 = vst [vmem:[%s170 + $0x190] sm:$0xff] %v863
      %928 = vst [vmem:[%s170 + $0x198] sm:$0xff] %v864
      %929 = vst [vmem:[%s170 + $0x1a0] sm:$0xff] %v865
      %930 = vst [vmem:[%s170 + $0x1a8] sm:$0xff] %v866
      %931 = vst [vmem:[%s170 + $0x1b0] sm:$0xff] %v867
      %932 = vst [vmem:[%s170 + $0x1b8] sm:$0xff] %v868
      %933 = vst [vmem:[%s170 + $0x1c0] sm:$0xff] %v869
      %934 = vst [vmem:[%s170 + $0x1c8] sm:$0xff] %v870
      %935 = vst [vmem:[%s170 + $0x1d0] sm:$0xff] %v871
      %936 = vst [vmem:[%s170 + $0x1d8] sm:$0xff] %v872
      %937 = vst [vmem:[%s170 + $0x1e0] sm:$0xff] %v873
      %938 = vst [vmem:[%s170 + $0x1e8] sm:$0xff] %v874
      %939 = vst [vmem:[%s170 + $0x1f0] sm:$0xff] %v875
      %940 = vst [vmem:[%s170 + $0x1f8] sm:$0xff] %v876
      %p941 = scmp.lt.s32.totalorder %s14, 1
      %s942 = scalar_select %p941, %s14, 1
      %s943 = smul.addr %s942, 64
      %s944 = smul.addr %s943, 8
      %s945 = scalar_lea.vmem %s3, %s944
      // Predicated region
      $region33: #{conv_transpose3d_clamp_div.1} parent=31 // pred_check
        %p946 = pneg %p100
      $region34: #{conv_transpose3d_clamp_div.1} parent=31 // pred_check_branch
        %948 = sbr.rel (%p946) target = $region36
      $region35: #{conv_transpose3d_clamp_div.1} parent=31 // pred_region
        _
      $region36: #{conv_transpose3d_clamp_div.1} parent=31 // pred_fallthru
        _
    $region32: #{conv_transpose3d_clamp_div.1} parent=5 // pred_fallthru
      _
    %p949 = scmp.le.s32.totalorder 2, %s9
    // Predicated region
    $region37: #{conv_transpose3d_clamp_div.1} parent=5 // pred_check
      %p950 = pneg %p949
    $region38: #{conv_transpose3d_clamp_div.1} parent=5 // pred_check_branch
      %952 = sbr.rel (%p950) target = $region40
    $region39: #{conv_transpose3d_clamp_div.1} parent=5 // pred_region
      %s953 = ssub.s32 %s9, 2
      // Predicated region
      $region41: #{conv_transpose3d_clamp_div.1} parent=39 // pred_check
        %p954 = pneg %p106
      $region42: #{conv_transpose3d_clamp_div.1} parent=39 // pred_check_branch
        %956 = sbr.rel (%p954) target = $region44
      $region43: #{conv_transpose3d_clamp_div.1} parent=39 // pred_region
        %p957 = scmp.lt.s32.totalorder %s15, 1
        %s958 = scalar_select %p957, %s15, 1
        %s959 = smul.addr %s958, 64
        %s960 = smul.addr %s959, 8
        %s961 = scalar_lea.vmem %s3, %s960
      $region44: #{conv_transpose3d_clamp_div.1} parent=39 // pred_fallthru
        _
    $region40: #{conv_transpose3d_clamp_div.1} parent=5 // pred_fallthru
      _
  $region6: #{conv_transpose3d_clamp_div.1} parent=0 // loop_footer
    %s13 = sadd.s32 1, %s9
  $region7: #{conv_transpose3d_clamp_div.1} parent=0 // loop_footer_branch
    %8 = sbr.rel target = $region3
  $region8: #{conv_transpose3d_clamp_div.1} parent=0 // loop_exit
    _

</llo_original>
